<compile_context>
chip_gen: v5e
topology: v5e:2x2
jax: 0.10.0
libtpu: 0.0.40
codegen_flags: <defaults>
</compile_context>

<pallas_src>
import jax
import jax.numpy as jnp
from jax import lax
from jax.experimental import pallas as pl
from jax.experimental.pallas import tpu as pltpu


_L1_MAX_TILE_ROWS = 1024     # (1024, 128) f32 block = 512 KiB per input buffer
_CLS_MAX_TILE_M = 8192       # lane-axis tile for ce/cbr ((9, 8192) f32 = 288 KiB)


# ----------------------------- small helpers ----------------------------------
def _cdiv(a, b):
    return -(-a // b)


def _round_up(x, m):
    return _cdiv(x, m) * m


def _field(outs, name):
    if isinstance(outs, dict):
        return outs[name]
    return getattr(outs, name)


def _newton_recip(x):
    """EUP approximate reciprocal + one Newton step (~full f32 accuracy)."""
    r = pl.reciprocal(x, approx=True)
    return r * (2.0 - x * r)


def _plane_weight(idx, plane_meta):
    """Per-element weight rebuilt in-kernel from static plane boundaries.

    plane_meta is a Python-static tuple of (start, end, 1/size).  Elements in
    the padded tail fall outside every plane and therefore get weight 0."""
    w = jnp.zeros(idx.shape, jnp.float32)
    for start, end, inv in plane_meta:
        w = w + jnp.where((idx >= start) & (idx < end),
                          jnp.float32(inv), jnp.float32(0.0))
    return w


# ----------------------------- kernels ----------------------------------------
def _make_l1_kernel(plane_meta, tile_rows, tiles_per_split):
    def kernel(a_ref, b_ref, o_ref, acc_ref):
        split = pl.program_id(0)
        step = pl.program_id(1)

        @pl.when(step == 0)
        def _():
            acc_ref[...] = jnp.zeros_like(acc_ref)

        a = a_ref[...].astype(jnp.float32)
        b = b_ref[...].astype(jnp.float32)

        tile_idx = split * tiles_per_split + step
        base = tile_idx * (tile_rows * 128)
        rows = lax.broadcasted_iota(jnp.int32, (tile_rows, 128), 0)
        cols = lax.broadcasted_iota(jnp.int32, (tile_rows, 128), 1)
        w = _plane_weight(base + rows * 128 + cols, plane_meta)

        acc_ref[...] += jnp.abs(a - b) * w

        @pl.when(step == pl.num_programs(1) - 1)
        def _():
            total = jnp.sum(acc_ref[...])
            o_ref[...] = jnp.zeros_like(o_ref) + total

    return kernel


def _make_ce_kernel(plane_meta, tile_m, tiles_per_split, num_classes):
    def kernel(logits_ref, tgt_ref, o_ref, acc_ref):
        split = pl.program_id(0)
        step = pl.program_id(1)

        @pl.when(step == 0)
        def _():
            acc_ref[...] = jnp.zeros_like(acc_ref)

        logits = logits_ref[...].astype(jnp.float32)          # (C, tile_m)
        tgt = tgt_ref[...]                                    # (1, tile_m) i32

        mx = jnp.max(logits, axis=0, keepdims=True)
        lse = jnp.log(jnp.sum(jnp.exp(logits - mx), axis=0, keepdims=True)) + mx
        onehot = (lax.broadcasted_iota(jnp.int32, (num_classes, tile_m), 0)
                  == tgt).astype(jnp.float32)
        picked = jnp.sum(onehot * logits, axis=0, keepdims=True)

        tile_idx = split * tiles_per_split + step
        idx = tile_idx * tile_m + lax.broadcasted_iota(jnp.int32, (1, tile_m), 1)
        w = _plane_weight(idx, plane_meta)

        acc_ref[...] += (lse - picked) * w

        @pl.when(step == pl.num_programs(1) - 1)
        def _():
            total = jnp.sum(acc_ref[...])
            o_ref[...] = jnp.zeros_like(o_ref) + total

    return kernel


def _make_cbr_kernel(plane_meta, tile_m, tiles_per_split, num_classes):
    def kernel(logits_ref, tgt_ref, o_ref, acc_ref):
        split = pl.program_id(0)
        step = pl.program_id(1)

        @pl.when(step == 0)
        def _():
            acc_ref[...] = jnp.zeros_like(acc_ref)

        logits = logits_ref[...].astype(jnp.float32)          # (C, tile_m)
        target = tgt_ref[...].astype(jnp.float32)             # (1, tile_m)

        mx = jnp.max(logits, axis=0, keepdims=True)
        e = jnp.exp(logits - mx)
        beta = e * _newton_recip(jnp.sum(e, axis=0, keepdims=True))
        labels = lax.broadcasted_iota(jnp.float32, (num_classes, tile_m), 0)
        pred_id = jnp.sum(beta * labels, axis=0, keepdims=True)
        pred_var = jnp.sum((labels - pred_id) ** 2 * beta, axis=0,
                           keepdims=True) + 1e-8
        log_var = jnp.log(pred_var)
        sq_err = (pred_id - target) ** 2

        tile_idx = split * tiles_per_split + step
        idx = tile_idx * tile_m + lax.broadcasted_iota(jnp.int32, (1, tile_m), 1)
        w = _plane_weight(idx, plane_meta)

        acc_ref[...] += (sq_err * _newton_recip(pred_var) + 0.001 * log_var) * w

        @pl.when(step == pl.num_programs(1) - 1)
        def _():
            total = jnp.sum(acc_ref[...])
            o_ref[...] = jnp.zeros_like(o_ref) + total

    return kernel


# ----------------------------- pallas_call runner ------------------------------
def _partial_sum_pallas_call(kernel, arrays, in_specs, n_splits, tiles_per_split,
                             scratch_shape):
    """Grid (parallel splits, arbitrary tiles); each split writes one (8,128)
    partial block on its last tile; wrapper sums the tiny partials."""
    out = pl.pallas_call(
        kernel,
        out_shape=jax.ShapeDtypeStruct((n_splits, 8, 128), jnp.float32),
        grid_spec=pltpu.PrefetchScalarGridSpec(
            num_scalar_prefetch=0,
            grid=(n_splits, tiles_per_split),
            in_specs=in_specs,
            out_specs=pl.BlockSpec((1, 8, 128), lambda c, i: (c, 0, 0)),
            scratch_shapes=[scratch_shape],
        ),
        compiler_params=pltpu.CompilerParams(
            dimension_semantics=("parallel", "arbitrary")),
    )(*arrays)
    return jnp.sum(out[:, 0, 0])


# ----------------------------- layout builders + runners -----------------------
def _l1_loss_sum(deltaxy_list, drloc_list):
    a_parts, b_parts, meta = [], [], []
    off = 0
    for a, b in zip(deltaxy_list, drloc_list):
        af, bf = a.reshape(-1), b.reshape(-1)
        n = af.size
        meta.append((off, off + n, 1.0 / n))       # F.l1_loss mean -> 1/size
        a_parts.append(af)
        b_parts.append(bf)
        off += n
    total = off

    dtype = jnp.result_type(*(p.dtype for p in a_parts + b_parts))
    if not jnp.issubdtype(dtype, jnp.floating):
        dtype = jnp.float32
    a = jnp.concatenate([p.astype(dtype) for p in a_parts])
    b = jnp.concatenate([p.astype(dtype) for p in b_parts])

    rows = _round_up(_cdiv(total, 128), 16)        # 16-row multiple: bf16-safe
    if rows <= _L1_MAX_TILE_ROWS:
        tile_rows, n_tiles = rows, 1
    else:
        tile_rows = _L1_MAX_TILE_ROWS
        n_tiles = _cdiv(rows, tile_rows)
    n_splits = 2 if n_tiles >= 2 else 1            # one partial per TC on v7x
    n_tiles = _round_up(n_tiles, n_splits)
    tiles_per_split = n_tiles // n_splits
    rows = n_tiles * tile_rows

    pad = rows * 128 - total
    a = jnp.pad(a, (0, pad)).reshape(rows, 128)
    b = jnp.pad(b, (0, pad)).reshape(rows, 128)

    kernel = _make_l1_kernel(tuple(meta), tile_rows, tiles_per_split)
    in_specs = [
        pl.BlockSpec((tile_rows, 128), lambda c, i, t=tiles_per_split: (c * t + i, 0)),
        pl.BlockSpec((tile_rows, 128), lambda c, i, t=tiles_per_split: (c * t + i, 0)),
    ]
    return _partial_sum_pallas_call(
        kernel, (a, b), in_specs, n_splits, tiles_per_split,
        pltpu.VMEM((tile_rows, 128), jnp.float32))


def _cls_loss_sum(deltaxy_list, drloc_list, mode):
    logit_parts, tgt_parts, meta = [], [], []
    off = 0
    num_classes = drloc_list[0].shape[1]
    for d, p in zip(deltaxy_list, drloc_list):
        n = p.shape[0]
        # (N, C, 2) -> (C, 2N): samples (x then y channel) on the 128-lane axis.
        lp = jnp.transpose(p, (1, 2, 0)).reshape(num_classes, 2 * n)
        tp = jnp.transpose(d, (1, 0)).reshape(1, 2 * n).astype(jnp.int32)
        logit_parts.append(lp)
        tgt_parts.append(tp)
        meta.append((off, off + 2 * n, 1.0 / n))   # per-channel mean -> 1/N
        off += 2 * n
    total = off

    ldtype = jnp.result_type(*(p.dtype for p in logit_parts))
    if not jnp.issubdtype(ldtype, jnp.floating):
        ldtype = jnp.float32
    logits = jnp.concatenate([p.astype(ldtype) for p in logit_parts], axis=1)
    tgt = jnp.concatenate(tgt_parts, axis=1)

    m_pad = _round_up(total, 128)
    if m_pad <= _CLS_MAX_TILE_M:
        tile_m, n_tiles = m_pad, 1
    else:
        tile_m = _CLS_MAX_TILE_M
        n_tiles = _cdiv(m_pad, tile_m)
    n_splits = 2 if n_tiles >= 2 else 1
    n_tiles = _round_up(n_tiles, n_splits)
    tiles_per_split = n_tiles // n_splits
    m_pad = n_tiles * tile_m

    pad = m_pad - total
    if pad:
        logits = jnp.pad(logits, ((0, 0), (0, pad)))
        tgt = jnp.pad(tgt, ((0, 0), (0, pad)))

    # TODO(synk): if the bundle dump shows masked sublane handling for C=9,
    # pad classes to 16 with very negative logits (exp -> 0) in this builder.
    make = _make_ce_kernel if mode == "ce" else _make_cbr_kernel
    kernel = make(tuple(meta), tile_m, tiles_per_split, num_classes)
    in_specs = [
        pl.BlockSpec((num_classes, tile_m),
                     lambda c, i, t=tiles_per_split: (0, c * t + i)),
        pl.BlockSpec((1, tile_m),
                     lambda c, i, t=tiles_per_split: (0, c * t + i)),
    ]
    return _partial_sum_pallas_call(
        kernel, (logits, tgt), in_specs, n_splits, tiles_per_split,
        pltpu.VMEM((1, tile_m), jnp.float32))


# ----------------------------- module port -------------------------------------
class CalSSLoss:
    """JAX/Pallas port of utils.customlosses.CalSSLoss (forward pass).

    All planes and both x/y channels reduce in a single fused Pallas kernel per
    call; per-plane mean normalisation is rebuilt in-kernel from static plane
    boundaries, so plane sizes may differ without streaming a weight array."""

    def __init__(self, drloc_mode="l1"):
        if drloc_mode not in ("l1", "ce", "cbr"):
            raise NotImplementedError("We only support l1, ce and cbr now.")
        self.drloc_mode = drloc_mode
        self._jit_total = jax.jit(self._total)

    def _total(self, deltaxy_list, drloc_list, lam):
        if self.drloc_mode == "l1":
            s = _l1_loss_sum(deltaxy_list, drloc_list)
        else:
            s = _cls_loss_sum(deltaxy_list, drloc_list, self.drloc_mode)
        return s * lam

    def __call__(self, outs, lambda_drloc=0.0):
        deltaxy = _field(outs, "deltaxy")
        drloc = _field(outs, "drloc")
        plz = _field(outs, "plz")
        n = min(len(deltaxy), len(drloc), len(plz))
        loss_drloc = self._jit_total(tuple(deltaxy[:n]), tuple(drloc[:n]),
                                     jnp.float32(lambda_drloc))
        # TODO(synk): original does .item() here; kept as a device scalar so the
        # loss stays jit-able and there is no host sync in the training step.
        all_losses = {"drloc": loss_drloc}
        loss = jnp.float32(0.0) + loss_drloc
        return loss, all_losses


# ----------------------------- pure-JAX references ------------------------------
def _ce_ref(logits, t):
    lse = jax.nn.logsumexp(logits, axis=1)
    picked = jnp.take_along_axis(logits, t[:, None], axis=1)[:, 0]
    return jnp.mean(lse - picked)


def _cbr_ref(logits, t):
    beta = jax.nn.softmax(logits, axis=1)
    labels = jnp.arange(logits.shape[1], dtype=jnp.float32)
    pid = jnp.sum(beta * labels[None, :], axis=1)
    var = jnp.sum((labels[None, :] - pid[:, None]) ** 2 * beta, axis=1) + 1e-8
    lv = jnp.log(var)
    return jnp.mean(jnp.exp(-lv) * (pid - t) ** 2 + 0.001 * lv)


if __name__ == "__main__":
    key = jax.random.PRNGKey(0)
    keys = jax.random.split(key, 12)
    C = 9  # relative-position classes

    # ---------------- l1 mode: two small planes of different sizes --------------
    delta_l1 = [jax.random.uniform(keys[0], (64, 2), jnp.float32, -1.0, 1.0),
                jax.random.uniform(keys[1], (32, 2), jnp.float32, -1.0, 1.0)]
    drloc_l1 = [jax.random.normal(keys[2], (64, 2), jnp.float32),
                jax.random.normal(keys[3], (32, 2), jnp.float32)]
    outs_l1 = {"deltaxy": delta_l1, "drloc": drloc_l1, "plz": [16, 32]}
    loss_l1, all_losses = CalSSLoss("l1")(outs_l1, lambda_drloc=0.5)
    loss_l1 = jax.block_until_ready(loss_l1)
    ref_l1 = sum(jnp.mean(jnp.abs(a - b)) for a, b in zip(delta_l1, drloc_l1)) * 0.5
    assert jnp.allclose(loss_l1, ref_l1, rtol=1e-5, atol=1e-5), (loss_l1, ref_l1)

    # ---------------- l1 mode: large bf16 plane (multi-tile + 2-way split) ------
    delta_big = [jax.random.normal(keys[8], (800, 256), jnp.bfloat16)]
    drloc_big = [jax.random.normal(keys[9], (800, 256), jnp.bfloat16)]
    outs_big = {"deltaxy": delta_big, "drloc": drloc_big, "plz": [16]}
    loss_big, _ = CalSSLoss("l1")(outs_big, lambda_drloc=1.0)
    loss_big = jax.block_until_ready(loss_big)
    ref_big = jnp.mean(jnp.abs(delta_big[0].astype(jnp.float32)
                               - drloc_big[0].astype(jnp.float32)))
    assert jnp.allclose(loss_big, ref_big, rtol=1e-3, atol=1e-3), (loss_big, ref_big)

    # ---------------- ce / cbr modes: two planes with different N ---------------
    delta_cls = [jax.random.randint(keys[4], (64, 2), 0, C).astype(jnp.float32),
                 jax.random.randint(keys[5], (48, 2), 0, C).astype(jnp.float32)]
    drloc_cls = [jax.random.normal(keys[6], (64, C, 2), jnp.float32),
                 jax.random.normal(keys[7], (48, C, 2), jnp.float32)]
    outs_cls = {"deltaxy": delta_cls, "drloc": drloc_cls, "plz": [16, 32]}

    loss_ce, _ = CalSSLoss("ce")(outs_cls, lambda_drloc=1.0)
    loss_ce = jax.block_until_ready(loss_ce)
    ref_ce = jnp.float32(0.0)
    for d, p in zip(delta_cls, drloc_cls):
        tx, ty = d[:, 0].astype(jnp.int32), d[:, 1].astype(jnp.int32)
        ref_ce = ref_ce + _ce_ref(p[:, :, 0], tx) + _ce_ref(p[:, :, 1], ty)
    assert jnp.allclose(loss_ce, ref_ce, rtol=1e-4, atol=1e-4), (loss_ce, ref_ce)

    loss_cbr, _ = CalSSLoss("cbr")(outs_cls, lambda_drloc=1.0)
    loss_cbr = jax.block_until_ready(loss_cbr)
    ref_cbr = jnp.float32(0.0)
    for d, p in zip(delta_cls, drloc_cls):
        tx = d[:, 0].astype(jnp.int32).astype(jnp.float32)
        ty = d[:, 1].astype(jnp.int32).astype(jnp.float32)
        ref_cbr = ref_cbr + _cbr_ref(p[:, :, 0], tx) + _cbr_ref(p[:, :, 1], ty)
    # cbr uses Newton-refined approximate reciprocals (EUP); keep tolerance modest.
    assert jnp.allclose(loss_cbr, ref_cbr, rtol=1e-3, atol=1e-3), (loss_cbr, ref_cbr)

    print("KERNEL_OK")
</pallas_src>

<mosaic_0001>
module attributes {stable_mosaic.version = 11 : i64} {
  func.func @kernel(%arg0: i32, %arg1: i32, %arg2: memref<16x128xf32, #tpu.memory_space<vmem>>, %arg3: memref<16x128xf32, #tpu.memory_space<vmem>>, %arg4: memref<1x8x128xf32, #tpu.memory_space<vmem>>, %arg5: memref<16x128xf32, #tpu.memory_space<vmem>>) attributes {dimension_semantics = [#tpu.dimension_semantics<parallel>, #tpu.dimension_semantics<arbitrary>], iteration_bounds = array<i64: 1, 1>, scalar_prefetch = 0 : i64, scratch_operands = 1 : i64, tpu.core_type = #tpu.core_type<tc>, window_params = [{transform_indices = @transform_0, window_bounds = array<i64: 16, 128>}, {transform_indices = @transform_1, window_bounds = array<i64: 16, 128>}, {transform_indices = @transform_2, window_bounds = array<i64: 1, 8, 128>}]} {
    %c0_i32 = arith.constant 0 : i32
    %0 = arith.cmpi eq, %arg1, %c0_i32 : i32
    %1 = arith.extui %0 : i1 to i32
    %c0_i32_0 = arith.constant 0 : i32
    %2 = arith.cmpi ne, %1, %c0_i32_0 : i32
    scf.if %2 {
      %cst_17 = arith.constant 0.000000e+00 : f32
      %43 = vector.broadcast %cst_17 : f32 to vector<16x128xf32>
      %c0_18 = arith.constant 0 : index
      %c0_19 = arith.constant 0 : index
      %44 = vector.load %arg5[%c0_18, %c0_19] : memref<16x128xf32, #tpu.memory_space<vmem>>, vector<16x128xf32>
      tpu.vector_store %arg5[%c0_18, %c0_19], %43 {strides = array<i32>} : memref<16x128xf32, #tpu.memory_space<vmem>>, vector<16x128xf32>,
    } else {
    }
    %c0 = arith.constant 0 : index
    %c0_1 = arith.constant 0 : index
    %3 = vector.load %arg2[%c0, %c0_1] : memref<16x128xf32, #tpu.memory_space<vmem>>, vector<16x128xf32>
    %c0_2 = arith.constant 0 : index
    %c0_3 = arith.constant 0 : index
    %4 = vector.load %arg3[%c0_2, %c0_3] : memref<16x128xf32, #tpu.memory_space<vmem>>, vector<16x128xf32>
    %c1_i32 = arith.constant 1 : i32
    %5 = arith.muli %arg0, %c1_i32 : i32
    %6 = arith.addi %5, %arg1 : i32
    %c2048_i32 = arith.constant 2048 : i32
    %7 = arith.muli %6, %c2048_i32 : i32
    %8 = tpu.iota {dimensions = array<i32: 0>} : vector<16x128xi32>
    %9 = tpu.iota {dimensions = array<i32: 1>} : vector<16x128xi32>
    %c128_i32 = arith.constant 128 : i32
    %10 = vector.broadcast %c128_i32 : i32 to vector<16x128xi32>
    %11 = arith.muli %8, %10 : vector<16x128xi32>
    %12 = vector.broadcast %7 : i32 to vector<16x128xi32>
    %13 = arith.addi %12, %11 : vector<16x128xi32>
    %14 = arith.addi %13, %9 : vector<16x128xi32>
    %cst = arith.constant 0.000000e+00 : f32
    %15 = vector.broadcast %cst : f32 to vector<16x128xf32>
    %c0_i32_4 = arith.constant 0 : i32
    %16 = vector.broadcast %c0_i32_4 : i32 to vector<16x128xi32>
    %17 = arith.cmpi sge, %14, %16 : vector<16x128xi32>
    %c128_i32_5 = arith.constant 128 : i32
    %18 = vector.broadcast %c128_i32_5 : i32 to vector<16x128xi32>
    %19 = arith.cmpi slt, %14, %18 : vector<16x128xi32>
    %20 = arith.andi %17, %19 : vector<16x128xi1>
    %cst_6 = arith.constant 7.812500e-03 : f32
    %cst_7 = arith.constant 0.000000e+00 : f32
    %21 = vector.broadcast %cst_6 : f32 to vector<16x128xf32>
    %22 = vector.broadcast %cst_7 : f32 to vector<16x128xf32>
    %23 = arith.select %20, %21, %22 : vector<16x128xi1>, vector<16x128xf32>
    %24 = arith.addf %15, %23 : vector<16x128xf32>
    %c128_i32_8 = arith.constant 128 : i32
    %25 = vector.broadcast %c128_i32_8 : i32 to vector<16x128xi32>
    %26 = arith.cmpi sge, %14, %25 : vector<16x128xi32>
    %c192_i32 = arith.constant 192 : i32
    %27 = vector.broadcast %c192_i32 : i32 to vector<16x128xi32>
    %28 = arith.cmpi slt, %14, %27 : vector<16x128xi32>
    %29 = arith.andi %26, %28 : vector<16x128xi1>
    %cst_9 = arith.constant 1.562500e-02 : f32
    %cst_10 = arith.constant 0.000000e+00 : f32
    %30 = vector.broadcast %cst_9 : f32 to vector<16x128xf32>
    %31 = vector.broadcast %cst_10 : f32 to vector<16x128xf32>
    %32 = arith.select %29, %30, %31 : vector<16x128xi1>, vector<16x128xf32>
    %33 = arith.addf %24, %32 : vector<16x128xf32>
    %c0_11 = arith.constant 0 : index
    %c0_12 = arith.constant 0 : index
    %34 = vector.load %arg5[%c0_11, %c0_12] : memref<16x128xf32, #tpu.memory_space<vmem>>, vector<16x128xf32>
    %35 = arith.subf %3, %4 : vector<16x128xf32>
    %36 = math.absf %35 : vector<16x128xf32>
    %37 = arith.mulf %36, %33 : vector<16x128xf32>
    %38 = arith.addf %34, %37 : vector<16x128xf32>
    %c0_13 = arith.constant 0 : index
    %c0_14 = arith.constant 0 : index
    %39 = vector.load %arg5[%c0_13, %c0_14] : memref<16x128xf32, #tpu.memory_space<vmem>>, vector<16x128xf32>
    tpu.vector_store %arg5[%c0_13, %c0_14], %38 {strides = array<i32>} : memref<16x128xf32, #tpu.memory_space<vmem>>, vector<16x128xf32>,
    %c0_i32_15 = arith.constant 0 : i32
    %40 = arith.cmpi eq, %arg1, %c0_i32_15 : i32
    %41 = arith.extui %40 : i1 to i32
    %c0_i32_16 = arith.constant 0 : i32
    %42 = arith.cmpi ne, %41, %c0_i32_16 : i32
    scf.if %42 {
      %c0_17 = arith.constant 0 : index
      %c0_18 = arith.constant 0 : index
      %43 = vector.load %arg5[%c0_17, %c0_18] : memref<16x128xf32, #tpu.memory_space<vmem>>, vector<16x128xf32>
      %44 = vector.shape_cast %43 : vector<16x128xf32> to vector<1x16x128xf32>
      %cst_19 = arith.constant dense<0.000000e+00> : vector<1xf32>
      %45 = vector.multi_reduction <add>, %44, %cst_19 [1, 2] : vector<1x16x128xf32> to vector<1xf32>
      %46 = vector.shape_cast %45 : vector<1xf32> to vector<1x1x1xf32>
      %47 = vector.extract %46[0, 0, 0] : f32 from vector<1x1x1xf32>
      %cst_20 = arith.constant 0.000000e+00 : f32
      %48 = vector.broadcast %cst_20 : f32 to vector<1x8x128xf32>
      %49 = vector.broadcast %47 : f32 to vector<1x8x128xf32>
      %50 = arith.addf %48, %49 : vector<1x8x128xf32>
      %c0_21 = arith.constant 0 : index
      %c0_22 = arith.constant 0 : index
      %c0_23 = arith.constant 0 : index
      %51 = vector.load %arg4[%c0_21, %c0_22, %c0_23] : memref<1x8x128xf32, #tpu.memory_space<vmem>>, vector<1x8x128xf32>
      tpu.vector_store %arg4[%c0_21, %c0_22, %c0_23], %50 {strides = array<i32>} : memref<1x8x128xf32, #tpu.memory_space<vmem>>, vector<1x8x128xf32>,
    } else {
    }
    return
  }
  func.func @transform_0(%arg0: i32, %arg1: i32) -> (i32, i32) {
    %c1_i32 = arith.constant 1 : i32
    %0 = arith.muli %arg0, %c1_i32 : i32
    %1 = arith.addi %0, %arg1 : i32
    %c0_i32 = arith.constant 0 : i32
    %c0_i32_0 = arith.constant 0 : i32
    return %1, %c0_i32 : i32, i32
  }
  func.func @transform_1(%arg0: i32, %arg1: i32) -> (i32, i32) {
    %c1_i32 = arith.constant 1 : i32
    %0 = arith.muli %arg0, %c1_i32 : i32
    %1 = arith.addi %0, %arg1 : i32
    %c0_i32 = arith.constant 0 : i32
    %c0_i32_0 = arith.constant 0 : i32
    return %1, %c0_i32 : i32, i32
  }
  func.func @transform_2(%arg0: i32, %arg1: i32) -> (i32, i32, i32) {
    %c0_i32 = arith.constant 0 : i32
    %c0_i32_0 = arith.constant 0 : i32
    %c0_i32_1 = arith.constant 0 : i32
    return %arg0, %c0_i32, %c0_i32_0 : i32, i32, i32
  }
}

</mosaic_0001>

<llo_original>
// kernel: _total.1
$region0: #{_total.1}
  #allocation0 [shape = 'u32[]', space=smem, size = 0x4, offset = 0x4, fixed_abs, tag = 'smem constant byte address 0x4 - core index']
  #allocation1 [shape = 'u32[72,128]{1,0:T(1,128)}', space=vmem, size = 0x9000, scoped, tag = 'internal scratch']
  #allocation2 [shape = 'f32[16,128]{1,0:T(8,128)}', space=vmem, size = 0x2000, scoped, tag = 'scratch operand']
  %s0 = inlined_call_operand.vmem [shape: f32[16,128], index: 0, kind: input, shape index: {}]
  %s1 = inlined_call_operand.vmem [shape: f32[16,128], index: 1, kind: input, shape index: {}]
  %s2 = inlined_call_operand.vmem [shape: f32[1,8,128], index: 2, kind: output, shape index: {}]
  %s3 = sld [smem:[#allocation0]]
  $region26: #{_total.1} parent=0
    _
  %s5 = ssub.s32 1, %s3
  %s6 = scalar_select 0, %s5, %s3
  // Predicated region
  $region2: #{_total.1} parent=0 // pred_check
    _
  $region3: #{_total.1} parent=0 // pred_check_branch
    %8 = sbr.rel (0) target = $region5
  $region4: #{_total.1} parent=0 // pred_region
    %s9 = sadd.s32 0, 0
    %s10 = smul.u32 2, %s9
    %p11 = scmp.lt.s32.totalorder %s10, 1
    %s12 = scalar_select %p11, %s10, 1
    %s13 = smul.addr %s12, 8
    %s14 = scalar_lea.vmem %s0, %s13
    %s15 = sadd.s32 0, 0
    %s16 = smul.u32 2, %s15
  $region5: #{_total.1} parent=0 // pred_fallthru
    _
  // Predicated region
  $region6: #{_total.1} parent=0 // pred_check
    _
  $region7: #{_total.1} parent=0 // pred_check_branch
    %18 = sbr.rel (0) target = $region9
  $region8: #{_total.1} parent=0 // pred_region
    %s19 = sadd.s32 0, 0
    %s20 = smul.u32 2, %s19
    %p21 = scmp.lt.s32.totalorder %s20, 1
    %s22 = scalar_select %p21, %s20, 1
    %s23 = smul.addr %s22, 8
    %s24 = scalar_lea.vmem %s1, %s23
    %s25 = sadd.s32 0, 0
    %s26 = smul.u32 2, %s25
  $region9: #{_total.1} parent=0 // pred_fallthru
    _
  %s27 = sadd.s32 0, 0
  %s28 = smul.u32 2, %s27
  %p29 = scmp.lt.s32.totalorder %s28, 1
  %s30 = scalar_select %p29, %s28, 1
  %s31 = smul.addr %s30, 8
  %s32 = scalar_lea.vmem %s0, %s31
  %s33 = sadd.s32 0, 0
  %s34 = smul.u32 2, %s33
  %p35 = scmp.lt.s32.totalorder %s34, 1
  %s36 = scalar_select %p35, %s34, 1
  %s37 = smul.addr %s36, 8
  %s38 = scalar_lea.vmem %s1, %s37
  %s39 = sadd.s32 0, 0
  %s40 = smul.u32 2, %s39
  %p41 = scmp.lt.s32.totalorder %s40, 1
  %s42 = scalar_select %p41, %s40, 1
  %s43 = smul.addr %s42, 8
  %s44 = scalar_lea.vmem %s0, %s43
  %s45 = sadd.s32 0, 0
  %s46 = smul.u32 2, %s45
  %s47 = sadd.s32 0, 0
  %s48 = smul.u32 2, %s47
  %p49 = scmp.lt.s32.totalorder %s48, 1
  %s50 = scalar_select %p49, %s48, 1
  %s51 = smul.addr %s50, 8
  %s52 = scalar_lea.vmem %s1, %s51
  %s53 = sadd.s32 0, 0
  %s54 = smul.u32 2, %s53
  %p55 = scmp.eq.s32.totalorder 0, 0
  // Predicated region
  $region10: #{_total.1} parent=0 // pred_check
    %p56 = pneg %p55
  $region11: #{_total.1} parent=0 // pred_check_branch
    %58 = sbr.rel (%p56) target = $region13
  $region12: #{_total.1} parent=0 // pred_region
    %59 = vst [vmem:[#allocation2] sm:$0xff] 0.0
    %60 = vst [vmem:[#allocation2 + $0x8] sm:$0xff] 0.0
  $region13: #{_total.1} parent=0 // pred_fallthru
    _
  %v61 = vld [vmem:[%s44] sm:$0xff]
  %v62 = vld [vmem:[%s44 + $0x8] sm:$0xff]
  %v63 = vld [vmem:[%s52] sm:$0xff]
  %v64 = vld [vmem:[%s52 + $0x8] sm:$0xff]
  %s65 = sadd.s32 0, 0
  %s66 = smul.u32 %s65, 2048
  %v67 = vlaneseq
  %v68 = vshrl.u32 %v67, 7
  %v69 = vadd.s32 %v68, 8
  %v70 = vlaneseq
  %v71 = vand.u32 %v70, 127
  %v72 = vmul.u32 %v68, 128
  %v73 = vmul.u32 %v69, 128
  %v74 = vstv %s66
  %v75 = vadd.s32 %v74, %v72
  %v76 = vadd.s32 %v74, %v73
  %v77 = vadd.s32 %v75, %v71
  %v78 = vadd.s32 %v76, %v71
  %vm79 = vcmp.ge.s32.totalorder %v77, 0
  %vm80 = vcmp.ge.s32.totalorder %v78, 0
  %vm81 = vcmp.lt.s32.totalorder %v77, 128
  %vm82 = vcmp.lt.s32.totalorder %v78, 128
  %vm83 = vmand %vm79, %vm81
  %vm84 = vmand %vm80, %vm82
  %v85 = vsel %vm83, 0.0078125, 0.0
  %v86 = vsel %vm84, 0.0078125, 0.0
  %v87 = vadd.f32 %v85, 0.0
  %v88 = vadd.f32 %v86, 0.0
  %vm89 = vcmp.ge.s32.totalorder %v77, 128
  %vm90 = vcmp.ge.s32.totalorder %v78, 128
  %vm91 = vcmp.lt.s32.totalorder %v77, 192
  %vm92 = vcmp.lt.s32.totalorder %v78, 192
  %vm93 = vmand %vm89, %vm91
  %vm94 = vmand %vm90, %vm92
  %v95 = vsel %vm93, 0.015625, 0.0
  %v96 = vsel %vm94, 0.015625, 0.0
  %v97 = vadd.f32 %v87, %v95
  %v98 = vadd.f32 %v88, %v96
  %v99 = vld [vmem:[#allocation2] sm:$0xff]
  %v100 = vld [vmem:[#allocation2 + $0x8] sm:$0xff]
  %v101 = vsub.f32 %v61, %v63
  %v102 = vsub.f32 %v62, %v64
  %v103 = vand.u32 2147483647, %v101
  %v104 = vand.u32 2147483647, %v102
  %v105 = vmul.f32 %v103, %v97
  %v106 = vmul.f32 %v104, %v98
  %v107 = vadd.f32 %v99, %v105
  %v108 = vadd.f32 %v100, %v106
  %109 = vst [vmem:[#allocation2] sm:$0xff] %v107
  %110 = vst [vmem:[#allocation2 + $0x8] sm:$0xff] %v108
  // Predicated region
  $region14: #{_total.1} parent=0 // pred_check
    %p111 = pneg %p55
  $region15: #{_total.1} parent=0 // pred_check_branch
    %113 = sbr.rel (%p111) target = $region17
  $region16: #{_total.1} parent=0 // pred_region
    %v114 = vld [vmem:[#allocation2] sm:$0xff]
    %v115 = vld [vmem:[#allocation2 + $0x8] sm:$0xff]
    %v116 = vadd.f32 %v114, %v115
    %117 = vadd.xlane.f32.xlu0 %v116
    %v118 = vpop.xlane.xlu0 %117
    %v119 = vrot.slane %v118, 4
    %v120 = vadd.f32 %v118, %v119
    %v121 = vrot.slane %v120, 2
    %v122 = vadd.f32 %v120, %v121
    %v123 = vrot.slane %v122, 1
    %v124 = vadd.f32 %v122, %v123
    %s125 = vtos %v124
    %v126 = vstv %s125
    %v127 = vadd.f32 %v126, 0.0
    %128 = vst [vmem:[%s2] sm:$0xff] %v127
  $region17: #{_total.1} parent=0 // pred_fallthru
    _
  // Predicated region
  $region18: #{_total.1} parent=0 // pred_check
    _
  $region19: #{_total.1} parent=0 // pred_check_branch
    %130 = sbr.rel (0) target = $region21
  $region20: #{_total.1} parent=0 // pred_region
    _
  $region21: #{_total.1} parent=0 // pred_fallthru
    _
  // Predicated region
  $region22: #{_total.1} parent=0 // pred_check
    _
  $region23: #{_total.1} parent=0 // pred_check_branch
    %132 = sbr.rel (0) target = $region25
  $region24: #{_total.1} parent=0 // pred_region
    _
  $region25: #{_total.1} parent=0 // pred_fallthru
    _

</llo_original>
